<compile_context>
chip_gen: v7x
topology: tpu7x:2x2x1
jax: 0.10.0
libtpu: 0.0.40
codegen_flags: <defaults>
</compile_context>

<pallas_src>
import functools

import jax
import jax.numpy as jnp
from jax.experimental import pallas as pl
from jax.experimental.pallas import tpu as pltpu


def _avg_sum_last_k_kernel(w_ref, *rest, num_layers):
    """rest = (layer_ref_0, ..., layer_ref_{k-1}, out_ref)."""
    layer_refs = rest[:num_layers]
    out_ref = rest[num_layers]

    # The output block index ignores the S grid axis, so out_ref is resident
    # across the whole reduction and doubles as the f32 accumulator.
    @pl.when(pl.program_id(2) == 0)
    def _init():
        out_ref[...] = jnp.zeros_like(out_ref)

    # Elementwise sum of the last-k layer tiles in their native dtype (VPU).
    # TODO(synk): on v5e with bf16 inputs this chain lowers to convert+f32 add;
    # restructure to pairwise f32 adds only if the VALU slot ever binds.
    x = layer_refs[0][...]
    for r in layer_refs[1:]:
        x = x + r[...]

    # Masked + normalized S-reduction as a single batched MXU contraction:
    #   out[b, 0, h] += sum_s w[b, 0, s] * x[b, s, h]
    # f32 accumulation comes for free from the otherwise-idle MXU;
    # Precision.HIGHEST keeps the f32 input path at full f32 accuracy.
    out_ref[...] += jnp.einsum(
        "bqs,bsh->bqh",
        w_ref[...],
        x,
        preferred_element_type=jnp.float32,
        precision=jax.lax.Precision.HIGHEST,
    )


def _largest_tile(dim, preferred, align):
    """Largest t <= preferred with t % align == 0 and dim % t == 0, else the full dim."""
    if dim <= preferred:
        return dim
    t = (preferred // align) * align
    while t >= align:
        if dim % t == 0:
            return t
        t -= align
    return dim


def _pick_tiles_and_vmem(B, S, H, itemsize, k):
    """Tile sizes + scoped-VMEM limit derived from the actual device VMEM capacity."""
    try:
        vmem_cap = int(pltpu.get_tpu_info().vmem_capacity_bytes)
    except Exception:
        vmem_cap = 64 << 20  # conservative (v7x-sized) fallback

    tb = _largest_tile(B, 8, 8)
    ts = _largest_tile(S, 256, 128)   # S is also the lane dim of the weight block
    th = _largest_tile(H, 512, 128)

    # Megacore (v7x, 2 TCs): only the B/H grid axes are "parallel".  If B gives
    # a single block, make sure H splits into >= 2 blocks so no core idles.
    if B // tb == 1 and H >= 256 and H // th < 2:
        th = min(th, _largest_tile(H, H // 2, 128))

    def working_set(ts_, th_):
        layers = 2 * k * tb * ts_ * th_ * itemsize        # double-buffered layer tiles
        weights = 2 * tb * 8 * max(ts_, 128) * itemsize   # double-buffered weight tiles (padded)
        out = tb * 8 * max(th_, 128) * 4                  # resident f32 output block (padded)
        return layers + weights + out

    # ~3/8 of physical VMEM: keeps big tiles on v5e/v6e (128 MiB) and shrinks
    # them on v7x (64 MiB) so double-buffering always fits with headroom.
    budget = max((vmem_cap * 3) // 8, 4 << 20)
    while working_set(ts, th) > budget and th % 256 == 0:
        th //= 2
    while working_set(ts, th) > budget and ts % 256 == 0:
        ts //= 2

    vmem_limit = int(min(max(2 * working_set(ts, th), 16 << 20), vmem_cap // 2))
    return tb, ts, th, vmem_limit


def average_sum_last_k(encoded_layers, pad_mask, k=4, tol=1e-6):
    assert k <= len(encoded_layers), \
        "k should be less than the number of encoder layers"
    layers = list(encoded_layers[-k:])
    B, S, H = layers[0].shape
    dtype = layers[0].dtype
    itemsize = jnp.dtype(dtype).itemsize

    # Fold the pad mask and the 1/(token_count + tol) normalizer into a single
    # per-token weight in the layer dtype (no in-kernel divide, no separate
    # lane-padded inv_den input, half the mask HBM traffic for bf16 layers):
    #   out[b, h] = sum_s w[b, s] * sum_l x_l[b, s, h],
    #   w[b, s]   = mask[b, s] / (sum_s mask[b, s] + tol)
    m = pad_mask.astype(jnp.float32)
    w = m / (jnp.sum(m, axis=1, keepdims=True) + jnp.float32(tol))
    w = w.astype(dtype).reshape(B, 1, S)   # lhs of the batched MXU contraction

    tb, ts, th, vmem_limit = _pick_tiles_and_vmem(B, S, H, itemsize, k)
    grid = (B // tb, H // th, S // ts)

    kernel = functools.partial(_avg_sum_last_k_kernel, num_layers=k)
    layer_spec = pl.BlockSpec((tb, ts, th), lambda i, j, s: (i, s, j))

    out = pl.pallas_call(
        kernel,
        out_shape=jax.ShapeDtypeStruct((B, 1, H), jnp.float32),
        grid=grid,
        in_specs=[pl.BlockSpec((tb, 1, ts), lambda i, j, s: (i, 0, s))]
                 + [layer_spec] * k,
        out_specs=pl.BlockSpec((tb, 1, th), lambda i, j, s: (i, 0, j)),
        compiler_params=pltpu.CompilerParams(
            dimension_semantics=("parallel", "parallel", "arbitrary"),
            vmem_limit_bytes=vmem_limit,
        ),
    )(w, *layers)

    # PyTorch's `encoder_avg * pad_mask.float()` promotes to float32, so the
    # module's output is float32 regardless of the encoder dtype.
    return out.reshape(B, H)


if __name__ == "__main__":
    key = jax.random.PRNGKey(0)
    B, S, H = 2, 8, 32
    num_encoder_layers = 6
    k = 4
    tol = 1e-6

    keys = jax.random.split(key, num_encoder_layers + 1)
    encoded_layers = [
        jax.random.normal(keys[i], (B, S, H), dtype=jnp.float32)
        for i in range(num_encoder_layers)
    ]
    # binary pad mask (1 = valid token), at least one valid token per row
    pad_mask = (jax.random.uniform(keys[-1], (B, S)) > 0.3).astype(jnp.int32)
    pad_mask = pad_mask.at[:, 0].set(1)

    out = average_sum_last_k(encoded_layers, pad_mask, k=k, tol=tol)
    out = jax.block_until_ready(out)

    # pure-JAX reference matching the PyTorch module
    enc_sum = jnp.stack(encoded_layers[-k:]).sum(0)            # [B, S, H]
    m = pad_mask.astype(jnp.float32)[:, :, None]               # [B, S, 1]
    ref = jnp.sum(enc_sum * m, axis=1) / (jnp.sum(m, axis=1) + tol)

    assert out.shape == (B, H)
    # Tolerance allows for the MXU's f32 accumulation order and for folding the
    # 1/(count+tol) scale into the weights (a few f32 ulps).
    assert jnp.allclose(out, ref, atol=1e-4, rtol=1e-4)
    print("KERNEL_OK")
</pallas_src>

<mosaic_0001>
module attributes {stable_mosaic.version = 11 : i64} {
  func.func @_avg_sum_last_k_kernel(%arg0: i32, %arg1: i32, %arg2: i32, %arg3: memref<2x1x8xf32, #tpu.memory_space<vmem>>, %arg4: memref<2x8x32xf32, #tpu.memory_space<vmem>>, %arg5: memref<2x8x32xf32, #tpu.memory_space<vmem>>, %arg6: memref<2x8x32xf32, #tpu.memory_space<vmem>>, %arg7: memref<2x8x32xf32, #tpu.memory_space<vmem>>, %arg8: memref<2x1x32xf32, #tpu.memory_space<vmem>>) attributes {dimension_semantics = [#tpu.dimension_semantics<parallel>, #tpu.dimension_semantics<parallel>, #tpu.dimension_semantics<arbitrary>], iteration_bounds = array<i64: 1, 1, 1>, scalar_prefetch = 0 : i64, scratch_operands = 0 : i64, tpu.core_type = #tpu.core_type<tc>, window_params = [{transform_indices = @transform_0, window_bounds = array<i64: 2, 1, 8>}, {transform_indices = @transform_1, window_bounds = array<i64: 2, 8, 32>}, {transform_indices = @transform_2, window_bounds = array<i64: 2, 8, 32>}, {transform_indices = @transform_3, window_bounds = array<i64: 2, 8, 32>}, {transform_indices = @transform_4, window_bounds = array<i64: 2, 8, 32>}, {transform_indices = @transform_5, window_bounds = array<i64: 2, 1, 32>}]} {
    %c0_i32 = arith.constant 0 : i32
    %0 = arith.cmpi eq, %arg2, %c0_i32 : i32
    %1 = arith.extui %0 : i1 to i32
    %c0_i32_0 = arith.constant 0 : i32
    %2 = arith.cmpi ne, %1, %c0_i32_0 : i32
    scf.if %2 {
      %cst_21 = arith.constant 0.000000e+00 : f32
      %15 = vector.broadcast %cst_21 : f32 to vector<2x1x32xf32>
      %c0_22 = arith.constant 0 : index
      %c0_23 = arith.constant 0 : index
      %c0_24 = arith.constant 0 : index
      %16 = vector.load %arg8[%c0_22, %c0_23, %c0_24] : memref<2x1x32xf32, #tpu.memory_space<vmem>>, vector<2x1x32xf32>
      tpu.vector_store %arg8[%c0_22, %c0_23, %c0_24], %15 {strides = array<i32>} : memref<2x1x32xf32, #tpu.memory_space<vmem>>, vector<2x1x32xf32>,
    } else {
    }
    %c0 = arith.constant 0 : index
    %c0_1 = arith.constant 0 : index
    %c0_2 = arith.constant 0 : index
    %3 = vector.load %arg4[%c0, %c0_1, %c0_2] : memref<2x8x32xf32, #tpu.memory_space<vmem>>, vector<2x8x32xf32>
    %c0_3 = arith.constant 0 : index
    %c0_4 = arith.constant 0 : index
    %c0_5 = arith.constant 0 : index
    %4 = vector.load %arg5[%c0_3, %c0_4, %c0_5] : memref<2x8x32xf32, #tpu.memory_space<vmem>>, vector<2x8x32xf32>
    %5 = arith.addf %3, %4 : vector<2x8x32xf32>
    %c0_6 = arith.constant 0 : index
    %c0_7 = arith.constant 0 : index
    %c0_8 = arith.constant 0 : index
    %6 = vector.load %arg6[%c0_6, %c0_7, %c0_8] : memref<2x8x32xf32, #tpu.memory_space<vmem>>, vector<2x8x32xf32>
    %7 = arith.addf %5, %6 : vector<2x8x32xf32>
    %c0_9 = arith.constant 0 : index
    %c0_10 = arith.constant 0 : index
    %c0_11 = arith.constant 0 : index
    %8 = vector.load %arg7[%c0_9, %c0_10, %c0_11] : memref<2x8x32xf32, #tpu.memory_space<vmem>>, vector<2x8x32xf32>
    %9 = arith.addf %7, %8 : vector<2x8x32xf32>
    %c0_12 = arith.constant 0 : index
    %c0_13 = arith.constant 0 : index
    %c0_14 = arith.constant 0 : index
    %10 = vector.load %arg8[%c0_12, %c0_13, %c0_14] : memref<2x1x32xf32, #tpu.memory_space<vmem>>, vector<2x1x32xf32>
    %c0_15 = arith.constant 0 : index
    %c0_16 = arith.constant 0 : index
    %c0_17 = arith.constant 0 : index
    %11 = vector.load %arg3[%c0_15, %c0_16, %c0_17] : memref<2x1x8xf32, #tpu.memory_space<vmem>>, vector<2x1x8xf32>
    "tpu.trace_start"() <{level = 10 : i32, message = "bqs,bsh->bqh"}> : () -> ()
    %cst = arith.constant dense<0.000000e+00> : vector<2x1x32xf32>
    %12 = tpu.matmul %11, %9, %cst {dimension_numbers = #tpu.dot_dimension_numbers<[2], [1], [1], [2], [0, 0, 0, 1, 1, 2], [0], [0]>, precision = #tpu.contract_precision<fp32>} : vector<2x1x8xf32>, vector<2x8x32xf32>, vector<2x1x32xf32> -> vector<2x1x32xf32>
    "tpu.trace_stop"() : () -> ()
    %13 = arith.addf %10, %12 : vector<2x1x32xf32>
    %c0_18 = arith.constant 0 : index
    %c0_19 = arith.constant 0 : index
    %c0_20 = arith.constant 0 : index
    %14 = vector.load %arg8[%c0_18, %c0_19, %c0_20] : memref<2x1x32xf32, #tpu.memory_space<vmem>>, vector<2x1x32xf32>
    tpu.vector_store %arg8[%c0_18, %c0_19, %c0_20], %13 {strides = array<i32>} : memref<2x1x32xf32, #tpu.memory_space<vmem>>, vector<2x1x32xf32>,
    return
  }
  func.func @transform_0(%arg0: i32, %arg1: i32, %arg2: i32) -> (i32, i32, i32) {
    %c0_i32 = arith.constant 0 : i32
    %c0_i32_0 = arith.constant 0 : i32
    return %arg0, %c0_i32, %arg2 : i32, i32, i32
  }
  func.func @transform_1(%arg0: i32, %arg1: i32, %arg2: i32) -> (i32, i32, i32) {
    %c0_i32 = arith.constant 0 : i32
    return %arg0, %arg2, %arg1 : i32, i32, i32
  }
  func.func @transform_2(%arg0: i32, %arg1: i32, %arg2: i32) -> (i32, i32, i32) {
    %c0_i32 = arith.constant 0 : i32
    return %arg0, %arg2, %arg1 : i32, i32, i32
  }
  func.func @transform_3(%arg0: i32, %arg1: i32, %arg2: i32) -> (i32, i32, i32) {
    %c0_i32 = arith.constant 0 : i32
    return %arg0, %arg2, %arg1 : i32, i32, i32
  }
  func.func @transform_4(%arg0: i32, %arg1: i32, %arg2: i32) -> (i32, i32, i32) {
    %c0_i32 = arith.constant 0 : i32
    return %arg0, %arg2, %arg1 : i32, i32, i32
  }
  func.func @transform_5(%arg0: i32, %arg1: i32, %arg2: i32) -> (i32, i32, i32) {
    %c0_i32 = arith.constant 0 : i32
    %c0_i32_0 = arith.constant 0 : i32
    return %arg0, %c0_i32, %arg1 : i32, i32, i32
  }
}

</mosaic_0001>

<llo_original>
// kernel: tpu_custom_call.1
$region0: #{tpu_custom_call.1}
  #allocation0 [shape = 'u32[]', space=smem, size = 0x4, offset = 0x4, fixed_abs, tag = 'smem constant byte address 0x4 - core index']
  #allocation1 [shape = 'u32[144,128]{1,0:T(1,128)}', space=vmem, size = 0x12000, scoped, tag = 'internal scratch']
  %s0 = inlined_call_operand.hbm [shape: f32[2,1,8], index: 0, kind: input, shape index: {}]
  %s1 = inlined_call_operand.hbm [shape: f32[2,8,32], index: 1, kind: input, shape index: {}]
  %s2 = inlined_call_operand.hbm [shape: f32[2,8,32], index: 2, kind: input, shape index: {}]
  %s3 = inlined_call_operand.hbm [shape: f32[2,8,32], index: 3, kind: input, shape index: {}]
  %s4 = inlined_call_operand.hbm [shape: f32[2,8,32], index: 4, kind: input, shape index: {}]
  %s5 = inlined_call_operand.hbm [shape: f32[2,1,32], index: 5, kind: output, shape index: {}]
  %s6 = sld [smem:[#allocation0]]
  $region54: #{tpu_custom_call.1} parent=0
    _
  %s8 = ssub.s32 1, %s6
  %s9 = scalar_select 0, %s8, %s6
  $region1: #{tpu_custom_call.1} parent=0
    #allocation2 [shape = 'u8[1024]{0}', space=vmem, size = 0x400, scoped, tag = 'input window, operand 0, single buffered']
    #allocation3 [shape = 's32[1]{0}', space=sflag, size = 0x4, scoped, tag = 'scoped memory for tpu_custom_call.1']
    #allocation4 [shape = 's32[1]{0}', space=sflag, size = 0x4, scoped, tag = 'scoped memory for tpu_custom_call.1']
    #allocation5 [shape = 'u8[8192]{0}', space=vmem, size = 0x2000, scoped, tag = 'input window, operand 1, single buffered']
    #allocation6 [shape = 's32[1]{0}', space=sflag, size = 0x4, scoped, tag = 'scoped memory for tpu_custom_call.1']
    #allocation7 [shape = 'u8[8192]{0}', space=vmem, size = 0x2000, scoped, tag = 'input window, operand 2, single buffered']
    #allocation8 [shape = 'u8[8192]{0}', space=vmem, size = 0x2000, scoped, tag = 'input window, operand 3, single buffered']
    #allocation9 [shape = 's32[1]{0}', space=sflag, size = 0x4, scoped, tag = 'scoped memory for tpu_custom_call.1']
    #allocation10 [shape = 'u8[8192]{0}', space=vmem, size = 0x2000, scoped, tag = 'input window, operand 4, single buffered']
    #allocation11 [shape = 'u8[1024]{0}', space=vmem, size = 0x400, scoped, tag = 'output window, operand 0, single buffered']
    %10 = vsyncpa [#allocation3], 0
    %11 = vsyncpa [#allocation6], 0
    %12 = vsyncpa [#allocation9], 0
    %13 = vsyncpa [#allocation4], 0
    // Predicated region
    $region2: #{tpu_custom_call.1} parent=1 // pred_check
      _
    $region3: #{tpu_custom_call.1} parent=1 // pred_check_branch
      %15 = sbr.rel (0) target = $region5
    $region4: #{tpu_custom_call.1} parent=1 // pred_region
      %s17 = ssub.s32 32, 32
      %18 = vsyncadd [#allocation3], %s17
      %s19 = sshll.u32 [#allocation2], 4
      %s20 = int_to_ptr.vmem [resolvable:$true] %s19
      %25 = dma.hbm_to_vmem [thread:$0]  %s0, 32, %s20, [#allocation3], 16, 16, 1
    $region5: #{tpu_custom_call.1} parent=1 // pred_fallthru
      _
    // Predicated region
    $region6: #{tpu_custom_call.1} parent=1 // pred_check
      _
    $region7: #{tpu_custom_call.1} parent=1 // pred_check_branch
      %27 = sbr.rel (0) target = $region9
    $region8: #{tpu_custom_call.1} parent=1 // pred_region
      %s29 = ssub.s32 256, 256
      %30 = vsyncadd [#allocation6], %s29
      %s31 = sshll.u32 [#allocation5], 4
      %s32 = int_to_ptr.vmem [resolvable:$true] %s31
      %37 = dma.hbm_to_vmem [thread:$0]  %s1, 256, %s32, [#allocation6], 128, 128, 8
    $region9: #{tpu_custom_call.1} parent=1 // pred_fallthru
      _
    // Predicated region
    $region10: #{tpu_custom_call.1} parent=1 // pred_check
      _
    $region11: #{tpu_custom_call.1} parent=1 // pred_check_branch
      %39 = sbr.rel (0) target = $region13
    $region12: #{tpu_custom_call.1} parent=1 // pred_region
      %s41 = ssub.s32 256, 256
      %42 = vsyncadd [#allocation6], %s41
      %s43 = sshll.u32 [#allocation7], 4
      %s44 = int_to_ptr.vmem [resolvable:$true] %s43
      %49 = dma.hbm_to_vmem [thread:$0]  %s2, 256, %s44, [#allocation6], 128, 128, 8
    $region13: #{tpu_custom_call.1} parent=1 // pred_fallthru
      _
    // Predicated region
    $region14: #{tpu_custom_call.1} parent=1 // pred_check
      _
    $region15: #{tpu_custom_call.1} parent=1 // pred_check_branch
      %51 = sbr.rel (0) target = $region17
    $region16: #{tpu_custom_call.1} parent=1 // pred_region
      %s53 = ssub.s32 256, 256
      %54 = vsyncadd [#allocation9], %s53
      %s55 = sshll.u32 [#allocation8], 4
      %s56 = int_to_ptr.vmem [resolvable:$true] %s55
      %61 = dma.hbm_to_vmem [thread:$0]  %s3, 256, %s56, [#allocation9], 128, 128, 8
    $region17: #{tpu_custom_call.1} parent=1 // pred_fallthru
      _
    // Predicated region
    $region18: #{tpu_custom_call.1} parent=1 // pred_check
      _
    $region19: #{tpu_custom_call.1} parent=1 // pred_check_branch
      %63 = sbr.rel (0) target = $region21
    $region20: #{tpu_custom_call.1} parent=1 // pred_region
      %s65 = ssub.s32 256, 256
      %66 = vsyncadd [#allocation9], %s65
      %s67 = sshll.u32 [#allocation10], 4
      %s68 = int_to_ptr.vmem [resolvable:$true] %s67
      %73 = dma.hbm_to_vmem [thread:$0]  %s4, 256, %s68, [#allocation9], 128, 128, 8
    $region21: #{tpu_custom_call.1} parent=1 // pred_fallthru
      _
    // Predicated region
    $region22: #{tpu_custom_call.1} parent=1 // pred_check
      _
    $region23: #{tpu_custom_call.1} parent=1 // pred_check_branch
      %75 = sbr.rel (0) target = $region25
    $region24: #{tpu_custom_call.1} parent=1 // pred_region
      %76 = dma.done [#allocation3], 32
    $region25: #{tpu_custom_call.1} parent=1 // pred_fallthru
      _
    // Predicated region
    $region26: #{tpu_custom_call.1} parent=1 // pred_check
      _
    $region27: #{tpu_custom_call.1} parent=1 // pred_check_branch
      %78 = sbr.rel (0) target = $region29
    $region28: #{tpu_custom_call.1} parent=1 // pred_region
      %79 = dma.done [#allocation6], 256
    $region29: #{tpu_custom_call.1} parent=1 // pred_fallthru
      _
    // Predicated region
    $region30: #{tpu_custom_call.1} parent=1 // pred_check
      _
    $region31: #{tpu_custom_call.1} parent=1 // pred_check_branch
      %81 = sbr.rel (0) target = $region33
    $region32: #{tpu_custom_call.1} parent=1 // pred_region
      %82 = dma.done [#allocation6], 256
    $region33: #{tpu_custom_call.1} parent=1 // pred_fallthru
      _
    // Predicated region
    $region34: #{tpu_custom_call.1} parent=1 // pred_check
      _
    $region35: #{tpu_custom_call.1} parent=1 // pred_check_branch
      %84 = sbr.rel (0) target = $region37
    $region36: #{tpu_custom_call.1} parent=1 // pred_region
      %85 = dma.done [#allocation9], 256
    $region37: #{tpu_custom_call.1} parent=1 // pred_fallthru
      _
    // Predicated region
    $region38: #{tpu_custom_call.1} parent=1 // pred_check
      _
    $region39: #{tpu_custom_call.1} parent=1 // pred_check_branch
      %87 = sbr.rel (0) target = $region41
    $region40: #{tpu_custom_call.1} parent=1 // pred_region
      %88 = dma.done [#allocation9], 256
    $region41: #{tpu_custom_call.1} parent=1 // pred_fallthru
      _
    %p89 = scmp.eq.s32.totalorder 0, 0
    // Predicated region
    $region42: #{tpu_custom_call.1} parent=1 // pred_check
      %p90 = pneg %p89
    $region43: #{tpu_custom_call.1} parent=1 // pred_check_branch
      %92 = sbr.rel (%p90) target = $region45
    $region44: #{tpu_custom_call.1} parent=1 // pred_region
      %vm93 = vcmask 253952
      %94 = vst.msk [vmem:[#allocation11] sm:$0x1] %vm93, 0.0
      %95 = vst.msk [vmem:[#allocation11 + $0x1] sm:$0x1] %vm93, 0.0
    $region45: #{tpu_custom_call.1} parent=1 // pred_fallthru
      _
    %v96 = vld [vmem:[#allocation5] sm:$0xff]
    %v97 = vld [vmem:[#allocation5 + $0x8] sm:$0xff]
    %v98 = vld [vmem:[#allocation7] sm:$0xff]
    %v99 = vld [vmem:[#allocation7 + $0x8] sm:$0xff]
    %v100 = vadd.f32 %v96, %v98
    %v101 = vadd.f32 %v97, %v99
    %v102 = vld [vmem:[#allocation8] sm:$0xff]
    %v103 = vld [vmem:[#allocation8 + $0x8] sm:$0xff]
    %v104 = vadd.f32 %v100, %v102
    %v105 = vadd.f32 %v101, %v103
    %v106 = vld [vmem:[#allocation10] sm:$0xff]
    %v107 = vld [vmem:[#allocation10 + $0x8] sm:$0xff]
    %v108 = vadd.f32 %v104, %v106
    %v109 = vadd.f32 %v105, %v107
    %v110 = vld [vmem:[#allocation11] sm:$0x1]
    %v111 = vld [vmem:[#allocation11 + $0x1] sm:$0x1]
    %v112 = vld [vmem:[#allocation2] sm:$0x1]
    %v113 = vld [vmem:[#allocation2 + $0x1] sm:$0x1]
    %vm114 = vcmask 64512
    %v116 = vsel %vm114, %v112, 0
    %118 = vmatprep.subr.mxu0 0.0
    %v119 = vand.u32 %v108, 4294901760
    %120 = vmatpush1.msra.mxu0 %v119
    %121 = vmatprep.subr.mxu0 0.0
    %122 = vmatpush1.msra.mxu0 0.0
    %123 = vmatprep.subr.mxu0 0.0
    %124 = vmatpush1.msra.mxu0 0.0
    %125 = vmatprep.subr.mxu0 0.0
    %126 = vmatpush1.msra.mxu0 0.0
    %127 = vmatprep.subr.mxu0 0.0
    %128 = vmatpush1.msra.mxu0 0.0
    %129 = vmatprep.subr.mxu0 0.0
    %130 = vmatpush1.msra.mxu0 0.0
    %131 = vmatprep.subr.mxu0 0.0
    %132 = vmatpush1.msra.mxu0 0.0
    %133 = vmatprep.subr.mxu0 0.0
    %134 = vmatpush1.msra.mxu0 0.0
    %135 = vmatprep.subr.mxu0 0.0
    %136 = vmatpush1.msra.mxu0 0.0
    %137 = vmatprep.subr.mxu0 0.0
    %138 = vmatpush1.msra.mxu0 0.0
    %139 = vmatprep.subr.mxu0 0.0
    %140 = vmatpush1.msra.mxu0 0.0
    %141 = vmatprep.subr.mxu0 0.0
    %142 = vmatpush1.msra.mxu0 0.0
    %143 = vmatprep.subr.mxu0 0.0
    %144 = vmatpush1.msra.mxu0 0.0
    %145 = vmatprep.subr.mxu0 0.0
    %146 = vmatpush1.msra.mxu0 0.0
    %147 = vmatprep.subr.mxu0 0.0
    %148 = vmatpush1.msra.mxu0 0.0
    %149 = vmatprep.subr.mxu0 0.0
    %150 = vmatpush1.msra.mxu0 0.0
    %151 = vmatprep.subr.mxu0 0.0
    %152 = vmatpush1.msra.mxu0 0.0
    %153 = vmatprep.subr.mxu0 0.0
    %154 = vmatpush1.msra.mxu0 0.0
    %155 = vmatprep.subr.mxu0 0.0
    %156 = vmatpush1.msra.mxu0 0.0
    %157 = vmatprep.subr.mxu0 0.0
    %158 = vmatpush1.msra.mxu0 0.0
    %159 = vmatprep.subr.mxu0 0.0
    %160 = vmatpush1.msra.mxu0 0.0
    %161 = vmatprep.subr.mxu0 0.0
    %162 = vmatpush1.msra.mxu0 0.0
    %163 = vmatprep.subr.mxu0 0.0
    %164 = vmatpush1.msra.mxu0 0.0
    %165 = vmatprep.subr.mxu0 0.0
    %166 = vmatpush1.msra.mxu0 0.0
    %167 = vmatprep.subr.mxu0 0.0
    %168 = vmatpush1.msra.mxu0 0.0
    %169 = vmatprep.subr.mxu0 0.0
    %170 = vmatpush1.msra.mxu0 0.0
    %171 = vmatprep.subr.mxu0 0.0
    %172 = vmatpush1.msra.mxu0 0.0
    %173 = vmatprep.subr.mxu0 0.0
    %174 = vmatpush1.msra.mxu0 0.0
    %175 = vmatprep.subr.mxu0 0.0
    %176 = vmatpush1.msra.mxu0 0.0
    %177 = vmatprep.subr.mxu0 0.0
    %178 = vmatpush1.msra.mxu0 0.0
    %179 = vmatprep.subr.mxu0 0.0
    %180 = vmatpush1.msra.mxu0 0.0
    %181 = vmatprep.subr.mxu0 0.0
    %182 = vmatpush1.msra.mxu0 0.0
    %183 = vmatprep.mubr.f32.mxu0 0.0
    %v184 = vand.u32 %v116, 4294901760
    %v185 = vsub.f32 %v116, %v184
    %v186 = vand.u32 %v185, 4294901760
    %v187 = vsub.f32 %v185, %v186
    %v188 = vand.u32 %v187, 4294901760
    %189 = vmatmul.mubr.f32.gmra.mrb[0].mxu0 %v188
    %v190 = vpop.f32.mrb[0].mxu0
    %v191 = vadd.f32 0.0, %v190
    %v192 = vpop.f32.mrb[0].mxu0
    %193 = vdwg.mxu0
    %194 = vmatprep.subr.mxu0 0.0
    %v195 = vand.u32 %v108, 4294901760
    %v196 = vsub.f32 %v108, %v195
    %v197 = vand.u32 %v196, 4294901760
    %v198 = vsub.f32 %v196, %v197
    %v199 = vand.u32 %v198, 4294901760
    %200 = vmatpush1.msra.mxu0 %v199
    %201 = vmatprep.subr.mxu0 0.0
    %202 = vmatpush1.msra.mxu0 0.0
    %203 = vmatprep.subr.mxu0 0.0
    %204 = vmatpush1.msra.mxu0 0.0
    %205 = vmatprep.subr.mxu0 0.0
    %206 = vmatpush1.msra.mxu0 0.0
    %207 = vmatprep.subr.mxu0 0.0
    %208 = vmatpush1.msra.mxu0 0.0
    %209 = vmatprep.subr.mxu0 0.0
    %210 = vmatpush1.msra.mxu0 0.0
    %211 = vmatprep.subr.mxu0 0.0
    %212 = vmatpush1.msra.mxu0 0.0
    %213 = vmatprep.subr.mxu0 0.0
    %214 = vmatpush1.msra.mxu0 0.0
    %215 = vmatprep.subr.mxu0 0.0
    %216 = vmatpush1.msra.mxu0 0.0
    %217 = vmatprep.subr.mxu0 0.0
    %218 = vmatpush1.msra.mxu0 0.0
    %219 = vmatprep.subr.mxu0 0.0
    %220 = vmatpush1.msra.mxu0 0.0
    %221 = vmatprep.subr.mxu0 0.0
    %222 = vmatpush1.msra.mxu0 0.0
    %223 = vmatprep.subr.mxu0 0.0
    %224 = vmatpush1.msra.mxu0 0.0
    %225 = vmatprep.subr.mxu0 0.0
    %226 = vmatpush1.msra.mxu0 0.0
    %227 = vmatprep.subr.mxu0 0.0
    %228 = vmatpush1.msra.mxu0 0.0
    %229 = vmatprep.subr.mxu0 0.0
    %230 = vmatpush1.msra.mxu0 0.0
    %231 = vmatprep.subr.mxu0 0.0
    %232 = vmatpush1.msra.mxu0 0.0
    %233 = vmatprep.subr.mxu0 0.0
    %234 = vmatpush1.msra.mxu0 0.0
    %235 = vmatprep.subr.mxu0 0.0
    %236 = vmatpush1.msra.mxu0 0.0
    %237 = vmatprep.subr.mxu0 0.0
    %238 = vmatpush1.msra.mxu0 0.0
    %239 = vmatprep.subr.mxu0 0.0
    %240 = vmatpush1.msra.mxu0 0.0
    %241 = vmatprep.subr.mxu0 0.0
    %242 = vmatpush1.msra.mxu0 0.0
    %243 = vmatprep.subr.mxu0 0.0
    %244 = vmatpush1.msra.mxu0 0.0
    %245 = vmatprep.subr.mxu0 0.0
    %246 = vmatpush1.msra.mxu0 0.0
    %247 = vmatprep.subr.mxu0 0.0
    %248 = vmatpush1.msra.mxu0 0.0
    %249 = vmatprep.subr.mxu0 0.0
    %250 = vmatpush1.msra.mxu0 0.0
    %251 = vmatprep.subr.mxu0 0.0
    %252 = vmatpush1.msra.mxu0 0.0
    %253 = vmatprep.subr.mxu0 0.0
    %254 = vmatpush1.msra.mxu0 0.0
    %255 = vmatprep.subr.mxu0 0.0
    %256 = vmatpush1.msra.mxu0 0.0
    %257 = vmatprep.subr.mxu0 0.0
    %258 = vmatpush1.msra.mxu0 0.0
    %259 = vmatprep.subr.mxu0 0.0
    %260 = vmatpush1.msra.mxu0 0.0
    %261 = vmatprep.subr.mxu0 0.0
    %262 = vmatpush1.msra.mxu0 0.0
    %263 = vmatprep.mubr.f32.mxu0 0.0
    %v264 = vand.u32 %v116, 4294901760
    %265 = vmatmul.mubr.f32.gmra.mrb[0].mxu0 %v264
    %v266 = vpop.f32.mrb[0].mxu0
    %v267 = vadd.f32 %v191, %v266
    %v268 = vpop.f32.mrb[0].mxu0
    %269 = vdwg.mxu0
    %270 = vmatprep.subr.mxu0 0.0
    %v271 = vand.u32 %v108, 4294901760
    %v272 = vsub.f32 %v108, %v271
    %273 = vmatpush1.msra.mxu0 %v272
    %274 = vmatprep.subr.mxu0 0.0
    %275 = vmatpush1.msra.mxu0 0.0
    %276 = vmatprep.subr.mxu0 0.0
    %277 = vmatpush1.msra.mxu0 0.0
    %278 = vmatprep.subr.mxu0 0.0
    %279 = vmatpush1.msra.mxu0 0.0
    %280 = vmatprep.subr.mxu0 0.0
    %281 = vmatpush1.msra.mxu0 0.0
    %282 = vmatprep.subr.mxu0 0.0
    %283 = vmatpush1.msra.mxu0 0.0
    %284 = vmatprep.subr.mxu0 0.0
    %285 = vmatpush1.msra.mxu0 0.0
    %286 = vmatprep.subr.mxu0 0.0
    %287 = vmatpush1.msra.mxu0 0.0
    %288 = vmatprep.subr.mxu0 0.0
    %289 = vmatpush1.msra.mxu0 0.0
    %290 = vmatprep.subr.mxu0 0.0
    %291 = vmatpush1.msra.mxu0 0.0
    %292 = vmatprep.subr.mxu0 0.0
    %293 = vmatpush1.msra.mxu0 0.0
    %294 = vmatprep.subr.mxu0 0.0
    %295 = vmatpush1.msra.mxu0 0.0
    %296 = vmatprep.subr.mxu0 0.0
    %297 = vmatpush1.msra.mxu0 0.0
    %298 = vmatprep.subr.mxu0 0.0
    %299 = vmatpush1.msra.mxu0 0.0
    %300 = vmatprep.subr.mxu0 0.0
    %301 = vmatpush1.msra.mxu0 0.0
    %302 = vmatprep.subr.mxu0 0.0
    %303 = vmatpush1.msra.mxu0 0.0
    %304 = vmatprep.subr.mxu0 0.0
    %305 = vmatpush1.msra.mxu0 0.0
    %306 = vmatprep.subr.mxu0 0.0
    %307 = vmatpush1.msra.mxu0 0.0
    %308 = vmatprep.subr.mxu0 0.0
    %309 = vmatpush1.msra.mxu0 0.0
    %310 = vmatprep.subr.mxu0 0.0
    %311 = vmatpush1.msra.mxu0 0.0
    %312 = vmatprep.subr.mxu0 0.0
    %313 = vmatpush1.msra.mxu0 0.0
    %314 = vmatprep.subr.mxu0 0.0
    %315 = vmatpush1.msra.mxu0 0.0
    %316 = vmatprep.subr.mxu0 0.0
    %317 = vmatpush1.msra.mxu0 0.0
    %318 = vmatprep.subr.mxu0 0.0
    %319 = vmatpush1.msra.mxu0 0.0
    %320 = vmatprep.subr.mxu0 0.0
    %321 = vmatpush1.msra.mxu0 0.0
    %322 = vmatprep.subr.mxu0 0.0
    %323 = vmatpush1.msra.mxu0 0.0
    %324 = vmatprep.subr.mxu0 0.0
    %325 = vmatpush1.msra.mxu0 0.0
    %326 = vmatprep.subr.mxu0 0.0
    %327 = vmatpush1.msra.mxu0 0.0
    %328 = vmatprep.subr.mxu0 0.0
    %329 = vmatpush1.msra.mxu0 0.0
    %330 = vmatprep.subr.mxu0 0.0
    %331 = vmatpush1.msra.mxu0 0.0
    %332 = vmatprep.subr.mxu0 0.0
    %333 = vmatpush1.msra.mxu0 0.0
    %334 = vmatprep.subr.mxu0 0.0
    %335 = vmatpush1.msra.mxu0 0.0
    %336 = vmatprep.mubr.f32.mxu0 0.0
    %v337 = vand.u32 %v116, 4294901760
    %v338 = vsub.f32 %v116, %v337
    %339 = vmatmul.mubr.f32.gmra.mrb[0].mxu0 %v338
    %v340 = vpop.f32.mrb[0].mxu0
    %v341 = vadd.f32 %v267, %v340
    %v342 = vpop.f32.mrb[0].mxu0
    %343 = vdwg.mxu0
    %344 = vmatprep.subr.mxu0 0.0
    %v345 = vand.u32 %v108, 4294901760
    %346 = vmatpush1.msra.mxu0 %v345
    %347 = vmatprep.subr.mxu0 0.0
    %348 = vmatpush1.msra.mxu0 0.0
    %349 = vmatprep.subr.mxu0 0.0
    %350 = vmatpush1.msra.mxu0 0.0
    %351 = vmatprep.subr.mxu0 0.0
    %352 = vmatpush1.msra.mxu0 0.0
    %353 = vmatprep.subr.mxu0 0.0
    %354 = vmatpush1.msra.mxu0 0.0
    %355 = vmatprep.subr.mxu0 0.0
    %356 = vmatpush1.msra.mxu0 0.0
    %357 = vmatprep.subr.mxu0 0.0
    %358 = vmatpush1.msra.mxu0 0.0
    %359 = vmatprep.subr.mxu0 0.0
    %360 = vmatpush1.msra.mxu0 0.0
    %361 = vmatprep.subr.mxu0 0.0
    %362 = vmatpush1.msra.mxu0 0.0
    %363 = vmatprep.subr.mxu0 0.0
    %364 = vmatpush1.msra.mxu0 0.0
    %365 = vmatprep.subr.mxu0 0.0
    %366 = vmatpush1.msra.mxu0 0.0
    %367 = vmatprep.subr.mxu0 0.0
    %368 = vmatpush1.msra.mxu0 0.0
    %369 = vmatprep.subr.mxu0 0.0
    %370 = vmatpush1.msra.mxu0 0.0
    %371 = vmatprep.subr.mxu0 0.0
    %372 = vmatpush1.msra.mxu0 0.0
    %373 = vmatprep.subr.mxu0 0.0
    %374 = vmatpush1.msra.mxu0 0.0
    %375 = vmatprep.subr.mxu0 0.0
    %376 = vmatpush1.msra.mxu0 0.0
    %377 = vmatprep.subr.mxu0 0.0
    %378 = vmatpush1.msra.mxu0 0.0
    %379 = vmatprep.subr.mxu0 0.0
    %380 = vmatpush1.msra.mxu0 0.0
    %381 = vmatprep.subr.mxu0 0.0
    %382 = vmatpush1.msra.mxu0 0.0
    %383 = vmatprep.subr.mxu0 0.0
    %384 = vmatpush1.msra.mxu0 0.0
    %385 = vmatprep.subr.mxu0 0.0
    %386 = vmatpush1.msra.mxu0 0.0
    %387 = vmatprep.subr.mxu0 0.0
    %388 = vmatpush1.msra.mxu0 0.0
    %389 = vmatprep.subr.mxu0 0.0
    %390 = vmatpush1.msra.mxu0 0.0
    %391 = vmatprep.subr.mxu0 0.0
    %392 = vmatpush1.msra.mxu0 0.0
    %393 = vmatprep.subr.mxu0 0.0
    %394 = vmatpush1.msra.mxu0 0.0
    %395 = vmatprep.subr.mxu0 0.0
    %396 = vmatpush1.msra.mxu0 0.0
    %397 = vmatprep.subr.mxu0 0.0
    %398 = vmatpush1.msra.mxu0 0.0
    %399 = vmatprep.subr.mxu0 0.0
    %400 = vmatpush1.msra.mxu0 0.0
    %401 = vmatprep.subr.mxu0 0.0
    %402 = vmatpush1.msra.mxu0 0.0
    %403 = vmatprep.subr.mxu0 0.0
    %404 = vmatpush1.msra.mxu0 0.0
    %405 = vmatprep.subr.mxu0 0.0
    %406 = vmatpush1.msra.mxu0 0.0
    %407 = vmatprep.subr.mxu0 0.0
    %408 = vmatpush1.msra.mxu0 0.0
    %409 = vmatprep.mubr.f32.mxu0 0.0
    %v410 = vand.u32 %v116, 4294901760
    %v411 = vsub.f32 %v116, %v410
    %v412 = vand.u32 %v411, 4294901760
    %413 = vmatmul.mubr.f32.gmra.mrb[0].mxu0 %v412
    %v414 = vpop.f32.mrb[0].mxu0
    %v415 = vadd.f32 %v341, %v414
    %v416 = vpop.f32.mrb[0].mxu0
    %417 = vdwg.mxu0
    %418 = vmatprep.subr.mxu0 0.0
    %v419 = vand.u32 %v108, 4294901760
    %v420 = vsub.f32 %v108, %v419
    %v421 = vand.u32 %v420, 4294901760
    %422 = vmatpush1.msra.mxu0 %v421
    %423 = vmatprep.subr.mxu0 0.0
    %424 = vmatpush1.msra.mxu0 0.0
    %425 = vmatprep.subr.mxu0 0.0
    %426 = vmatpush1.msra.mxu0 0.0
    %427 = vmatprep.subr.mxu0 0.0
    %428 = vmatpush1.msra.mxu0 0.0
    %429 = vmatprep.subr.mxu0 0.0
    %430 = vmatpush1.msra.mxu0 0.0
    %431 = vmatprep.subr.mxu0 0.0
    %432 = vmatpush1.msra.mxu0 0.0
    %433 = vmatprep.subr.mxu0 0.0
    %434 = vmatpush1.msra.mxu0 0.0
    %435 = vmatprep.subr.mxu0 0.0
    %436 = vmatpush1.msra.mxu0 0.0
    %437 = vmatprep.subr.mxu0 0.0
    %438 = vmatpush1.msra.mxu0 0.0
    %439 = vmatprep.subr.mxu0 0.0
    %440 = vmatpush1.msra.mxu0 0.0
    %441 = vmatprep.subr.mxu0 0.0
    %442 = vmatpush1.msra.mxu0 0.0
    %443 = vmatprep.subr.mxu0 0.0
    %444 = vmatpush1.msra.mxu0 0.0
    %445 = vmatprep.subr.mxu0 0.0
    %446 = vmatpush1.msra.mxu0 0.0
    %447 = vmatprep.subr.mxu0 0.0
    %448 = vmatpush1.msra.mxu0 0.0
    %449 = vmatprep.subr.mxu0 0.0
    %450 = vmatpush1.msra.mxu0 0.0
    %451 = vmatprep.subr.mxu0 0.0
    %452 = vmatpush1.msra.mxu0 0.0
    %453 = vmatprep.subr.mxu0 0.0
    %454 = vmatpush1.msra.mxu0 0.0
    %455 = vmatprep.subr.mxu0 0.0
    %456 = vmatpush1.msra.mxu0 0.0
    %457 = vmatprep.subr.mxu0 0.0
    %458 = vmatpush1.msra.mxu0 0.0
    %459 = vmatprep.subr.mxu0 0.0
    %460 = vmatpush1.msra.mxu0 0.0
    %461 = vmatprep.subr.mxu0 0.0
    %462 = vmatpush1.msra.mxu0 0.0
    %463 = vmatprep.subr.mxu0 0.0
    %464 = vmatpush1.msra.mxu0 0.0
    %465 = vmatprep.subr.mxu0 0.0
    %466 = vmatpush1.msra.mxu0 0.0
    %467 = vmatprep.subr.mxu0 0.0
    %468 = vmatpush1.msra.mxu0 0.0
    %469 = vmatprep.subr.mxu0 0.0
    %470 = vmatpush1.msra.mxu0 0.0
    %471 = vmatprep.subr.mxu0 0.0
    %472 = vmatpush1.msra.mxu0 0.0
    %473 = vmatprep.subr.mxu0 0.0
    %474 = vmatpush1.msra.mxu0 0.0
    %475 = vmatprep.subr.mxu0 0.0
    %476 = vmatpush1.msra.mxu0 0.0
    %477 = vmatprep.subr.mxu0 0.0
    %478 = vmatpush1.msra.mxu0 0.0
    %479 = vmatprep.subr.mxu0 0.0
    %480 = vmatpush1.msra.mxu0 0.0
    %481 = vmatprep.subr.mxu0 0.0
    %482 = vmatpush1.msra.mxu0 0.0
    %483 = vmatprep.subr.mxu0 0.0
    %484 = vmatpush1.msra.mxu0 0.0
    %485 = vmatprep.mubr.f32.mxu0 0.0
    %v486 = vand.u32 %v116, 4294901760
    %487 = vmatmul.mubr.f32.gmra.mrb[0].mxu0 %v486
    %v488 = vpop.f32.mrb[0].mxu0
    %v489 = vadd.f32 %v415, %v488
    %v490 = vpop.f32.mrb[0].mxu0
    %491 = vdwg.mxu0
    %492 = vmatprep.subr.mxu0 0.0
    %v493 = vand.u32 %v108, 4294901760
    %494 = vmatpush1.msra.mxu0 %v493
    %495 = vmatprep.subr.mxu0 0.0
    %496 = vmatpush1.msra.mxu0 0.0
    %497 = vmatprep.subr.mxu0 0.0
    %498 = vmatpush1.msra.mxu0 0.0
    %499 = vmatprep.subr.mxu0 0.0
    %500 = vmatpush1.msra.mxu0 0.0
    %501 = vmatprep.subr.mxu0 0.0
    %502 = vmatpush1.msra.mxu0 0.0
    %503 = vmatprep.subr.mxu0 0.0
    %504 = vmatpush1.msra.mxu0 0.0
    %505 = vmatprep.subr.mxu0 0.0
    %506 = vmatpush1.msra.mxu0 0.0
    %507 = vmatprep.subr.mxu0 0.0
    %508 = vmatpush1.msra.mxu0 0.0
    %509 = vmatprep.subr.mxu0 0.0
    %510 = vmatpush1.msra.mxu0 0.0
    %511 = vmatprep.subr.mxu0 0.0
    %512 = vmatpush1.msra.mxu0 0.0
    %513 = vmatprep.subr.mxu0 0.0
    %514 = vmatpush1.msra.mxu0 0.0
    %515 = vmatprep.subr.mxu0 0.0
    %516 = vmatpush1.msra.mxu0 0.0
    %517 = vmatprep.subr.mxu0 0.0
    %518 = vmatpush1.msra.mxu0 0.0
    %519 = vmatprep.subr.mxu0 0.0
    %520 = vmatpush1.msra.mxu0 0.0
    %521 = vmatprep.subr.mxu0 0.0
    %522 = vmatpush1.msra.mxu0 0.0
    %523 = vmatprep.subr.mxu0 0.0
    %524 = vmatpush1.msra.mxu0 0.0
    %525 = vmatprep.subr.mxu0 0.0
    %526 = vmatpush1.msra.mxu0 0.0
    %527 = vmatprep.subr.mxu0 0.0
    %528 = vmatpush1.msra.mxu0 0.0
    %529 = vmatprep.subr.mxu0 0.0
    %530 = vmatpush1.msra.mxu0 0.0
    %531 = vmatprep.subr.mxu0 0.0
    %532 = vmatpush1.msra.mxu0 0.0
    %533 = vmatprep.subr.mxu0 0.0
    %534 = vmatpush1.msra.mxu0 0.0
    %535 = vmatprep.subr.mxu0 0.0
    %536 = vmatpush1.msra.mxu0 0.0
    %537 = vmatprep.subr.mxu0 0.0
    %538 = vmatpush1.msra.mxu0 0.0
    %539 = vmatprep.subr.mxu0 0.0
    %540 = vmatpush1.msra.mxu0 0.0
    %541 = vmatprep.subr.mxu0 0.0
    %542 = vmatpush1.msra.mxu0 0.0
    %543 = vmatprep.subr.mxu0 0.0
    %544 = vmatpush1.msra.mxu0 0.0
    %545 = vmatprep.subr.mxu0 0.0
    %546 = vmatpush1.msra.mxu0 0.0
    %547 = vmatprep.subr.mxu0 0.0
    %548 = vmatpush1.msra.mxu0 0.0
    %549 = vmatprep.subr.mxu0 0.0
    %550 = vmatpush1.msra.mxu0 0.0
    %551 = vmatprep.subr.mxu0 0.0
    %552 = vmatpush1.msra.mxu0 0.0
    %553 = vmatprep.subr.mxu0 0.0
    %554 = vmatpush1.msra.mxu0 0.0
    %555 = vmatprep.subr.mxu0 0.0
    %556 = vmatpush1.msra.mxu0 0.0
    %557 = vmatprep.mubr.f32.mxu0 0.0
    %v558 = vand.u32 %v116, 4294901760
    %559 = vmatmul.mubr.f32.gmra.mrb[0].mxu0 %v558
    %v560 = vpop.f32.mrb[0].mxu0
    %v561 = vadd.f32 %v489, %v560
    %v562 = vpop.f32.mrb[0].mxu0
    %563 = vdwg.mxu0
    %v565 = vsel %vm114, %v113, 0
    %567 = vmatprep.subr.mxu0 0.0
    %v568 = vand.u32 %v109, 4294901760
    %569 = vmatpush1.msra.mxu0 %v568
    %570 = vmatprep.subr.mxu0 0.0
    %571 = vmatpush1.msra.mxu0 0.0
    %572 = vmatprep.subr.mxu0 0.0
    %573 = vmatpush1.msra.mxu0 0.0
    %574 = vmatprep.subr.mxu0 0.0
    %575 = vmatpush1.msra.mxu0 0.0
    %576 = vmatprep.subr.mxu0 0.0
    %577 = vmatpush1.msra.mxu0 0.0
    %578 = vmatprep.subr.mxu0 0.0
    %579 = vmatpush1.msra.mxu0 0.0
    %580 = vmatprep.subr.mxu0 0.0
    %581 = vmatpush1.msra.mxu0 0.0
    %582 = vmatprep.subr.mxu0 0.0
    %583 = vmatpush1.msra.mxu0 0.0
    %584 = vmatprep.subr.mxu0 0.0
    %585 = vmatpush1.msra.mxu0 0.0
    %586 = vmatprep.subr.mxu0 0.0
    %587 = vmatpush1.msra.mxu0 0.0
    %588 = vmatprep.subr.mxu0 0.0
    %589 = vmatpush1.msra.mxu0 0.0
    %590 = vmatprep.subr.mxu0 0.0
    %591 = vmatpush1.msra.mxu0 0.0
    %592 = vmatprep.subr.mxu0 0.0
    %593 = vmatpush1.msra.mxu0 0.0
    %594 = vmatprep.subr.mxu0 0.0
    %595 = vmatpush1.msra.mxu0 0.0
    %596 = vmatprep.subr.mxu0 0.0
    %597 = vmatpush1.msra.mxu0 0.0
    %598 = vmatprep.subr.mxu0 0.0
    %599 = vmatpush1.msra.mxu0 0.0
    %600 = vmatprep.subr.mxu0 0.0
    %601 = vmatpush1.msra.mxu0 0.0
    %602 = vmatprep.subr.mxu0 0.0
    %603 = vmatpush1.msra.mxu0 0.0
    %604 = vmatprep.subr.mxu0 0.0
    %605 = vmatpush1.msra.mxu0 0.0
    %606 = vmatprep.subr.mxu0 0.0
    %607 = vmatpush1.msra.mxu0 0.0
    %608 = vmatprep.subr.mxu0 0.0
    %609 = vmatpush1.msra.mxu0 0.0
    %610 = vmatprep.subr.mxu0 0.0
    %611 = vmatpush1.msra.mxu0 0.0
    %612 = vmatprep.subr.mxu0 0.0
    %613 = vmatpush1.msra.mxu0 0.0
    %614 = vmatprep.subr.mxu0 0.0
    %615 = vmatpush1.msra.mxu0 0.0
    %616 = vmatprep.subr.mxu0 0.0
    %617 = vmatpush1.msra.mxu0 0.0
    %618 = vmatprep.subr.mxu0 0.0
    %619 = vmatpush1.msra.mxu0 0.0
    %620 = vmatprep.subr.mxu0 0.0
    %621 = vmatpush1.msra.mxu0 0.0
    %622 = vmatprep.subr.mxu0 0.0
    %623 = vmatpush1.msra.mxu0 0.0
    %624 = vmatprep.subr.mxu0 0.0
    %625 = vmatpush1.msra.mxu0 0.0
    %626 = vmatprep.subr.mxu0 0.0
    %627 = vmatpush1.msra.mxu0 0.0
    %628 = vmatprep.subr.mxu0 0.0
    %629 = vmatpush1.msra.mxu0 0.0
    %630 = vmatprep.subr.mxu0 0.0
    %631 = vmatpush1.msra.mxu0 0.0
    %632 = vmatprep.mubr.f32.mxu0 0.0
    %v633 = vand.u32 %v565, 4294901760
    %v634 = vsub.f32 %v565, %v633
    %v635 = vand.u32 %v634, 4294901760
    %v636 = vsub.f32 %v634, %v635
    %v637 = vand.u32 %v636, 4294901760
    %638 = vmatmul.mubr.f32.gmra.mrb[0].mxu0 %v637
    %v639 = vpop.f32.mrb[0].mxu0
    %v640 = vadd.f32 0.0, %v639
    %v641 = vpop.f32.mrb[0].mxu0
    %642 = vdwg.mxu0
    %643 = vmatprep.subr.mxu0 0.0
    %v644 = vand.u32 %v109, 4294901760
    %v645 = vsub.f32 %v109, %v644
    %v646 = vand.u32 %v645, 4294901760
    %v647 = vsub.f32 %v645, %v646
    %v648 = vand.u32 %v647, 4294901760
    %649 = vmatpush1.msra.mxu0 %v648
    %650 = vmatprep.subr.mxu0 0.0
    %651 = vmatpush1.msra.mxu0 0.0
    %652 = vmatprep.subr.mxu0 0.0
    %653 = vmatpush1.msra.mxu0 0.0
    %654 = vmatprep.subr.mxu0 0.0
    %655 = vmatpush1.msra.mxu0 0.0
    %656 = vmatprep.subr.mxu0 0.0
    %657 = vmatpush1.msra.mxu0 0.0
    %658 = vmatprep.subr.mxu0 0.0
    %659 = vmatpush1.msra.mxu0 0.0
    %660 = vmatprep.subr.mxu0 0.0
    %661 = vmatpush1.msra.mxu0 0.0
    %662 = vmatprep.subr.mxu0 0.0
    %663 = vmatpush1.msra.mxu0 0.0
    %664 = vmatprep.subr.mxu0 0.0
    %665 = vmatpush1.msra.mxu0 0.0
    %666 = vmatprep.subr.mxu0 0.0
    %667 = vmatpush1.msra.mxu0 0.0
    %668 = vmatprep.subr.mxu0 0.0
    %669 = vmatpush1.msra.mxu0 0.0
    %670 = vmatprep.subr.mxu0 0.0
    %671 = vmatpush1.msra.mxu0 0.0
    %672 = vmatprep.subr.mxu0 0.0
    %673 = vmatpush1.msra.mxu0 0.0
    %674 = vmatprep.subr.mxu0 0.0
    %675 = vmatpush1.msra.mxu0 0.0
    %676 = vmatprep.subr.mxu0 0.0
    %677 = vmatpush1.msra.mxu0 0.0
    %678 = vmatprep.subr.mxu0 0.0
    %679 = vmatpush1.msra.mxu0 0.0
    %680 = vmatprep.subr.mxu0 0.0
    %681 = vmatpush1.msra.mxu0 0.0
    %682 = vmatprep.subr.mxu0 0.0
    %683 = vmatpush1.msra.mxu0 0.0
    %684 = vmatprep.subr.mxu0 0.0
    %685 = vmatpush1.msra.mxu0 0.0
    %686 = vmatprep.subr.mxu0 0.0
    %687 = vmatpush1.msra.mxu0 0.0
    %688 = vmatprep.subr.mxu0 0.0
    %689 = vmatpush1.msra.mxu0 0.0
    %690 = vmatprep.subr.mxu0 0.0
    %691 = vmatpush1.msra.mxu0 0.0
    %692 = vmatprep.subr.mxu0 0.0
    %693 = vmatpush1.msra.mxu0 0.0
    %694 = vmatprep.subr.mxu0 0.0
    %695 = vmatpush1.msra.mxu0 0.0
    %696 = vmatprep.subr.mxu0 0.0
    %697 = vmatpush1.msra.mxu0 0.0
    %698 = vmatprep.subr.mxu0 0.0
    %699 = vmatpush1.msra.mxu0 0.0
    %700 = vmatprep.subr.mxu0 0.0
    %701 = vmatpush1.msra.mxu0 0.0
    %702 = vmatprep.subr.mxu0 0.0
    %703 = vmatpush1.msra.mxu0 0.0
    %704 = vmatprep.subr.mxu0 0.0
    %705 = vmatpush1.msra.mxu0 0.0
    %706 = vmatprep.subr.mxu0 0.0
    %707 = vmatpush1.msra.mxu0 0.0
    %708 = vmatprep.subr.mxu0 0.0
    %709 = vmatpush1.msra.mxu0 0.0
    %710 = vmatprep.subr.mxu0 0.0
    %711 = vmatpush1.msra.mxu0 0.0
    %712 = vmatprep.mubr.f32.mxu0 0.0
    %v713 = vand.u32 %v565, 4294901760
    %714 = vmatmul.mubr.f32.gmra.mrb[0].mxu0 %v713
    %v715 = vpop.f32.mrb[0].mxu0
    %v716 = vadd.f32 %v640, %v715
    %v717 = vpop.f32.mrb[0].mxu0
    %718 = vdwg.mxu0
    %719 = vmatprep.subr.mxu0 0.0
    %v720 = vand.u32 %v109, 4294901760
    %v721 = vsub.f32 %v109, %v720
    %722 = vmatpush1.msra.mxu0 %v721
    %723 = vmatprep.subr.mxu0 0.0
    %724 = vmatpush1.msra.mxu0 0.0
    %725 = vmatprep.subr.mxu0 0.0
    %726 = vmatpush1.msra.mxu0 0.0
    %727 = vmatprep.subr.mxu0 0.0
    %728 = vmatpush1.msra.mxu0 0.0
    %729 = vmatprep.subr.mxu0 0.0
    %730 = vmatpush1.msra.mxu0 0.0
    %731 = vmatprep.subr.mxu0 0.0
    %732 = vmatpush1.msra.mxu0 0.0
    %733 = vmatprep.subr.mxu0 0.0
    %734 = vmatpush1.msra.mxu0 0.0
    %735 = vmatprep.subr.mxu0 0.0
    %736 = vmatpush1.msra.mxu0 0.0
    %737 = vmatprep.subr.mxu0 0.0
    %738 = vmatpush1.msra.mxu0 0.0
    %739 = vmatprep.subr.mxu0 0.0
    %740 = vmatpush1.msra.mxu0 0.0
    %741 = vmatprep.subr.mxu0 0.0
    %742 = vmatpush1.msra.mxu0 0.0
    %743 = vmatprep.subr.mxu0 0.0
    %744 = vmatpush1.msra.mxu0 0.0
    %745 = vmatprep.subr.mxu0 0.0
    %746 = vmatpush1.msra.mxu0 0.0
    %747 = vmatprep.subr.mxu0 0.0
    %748 = vmatpush1.msra.mxu0 0.0
    %749 = vmatprep.subr.mxu0 0.0
    %750 = vmatpush1.msra.mxu0 0.0
    %751 = vmatprep.subr.mxu0 0.0
    %752 = vmatpush1.msra.mxu0 0.0
    %753 = vmatprep.subr.mxu0 0.0
    %754 = vmatpush1.msra.mxu0 0.0
    %755 = vmatprep.subr.mxu0 0.0
    %756 = vmatpush1.msra.mxu0 0.0
    %757 = vmatprep.subr.mxu0 0.0
    %758 = vmatpush1.msra.mxu0 0.0
    %759 = vmatprep.subr.mxu0 0.0
    %760 = vmatpush1.msra.mxu0 0.0
    %761 = vmatprep.subr.mxu0 0.0
    %762 = vmatpush1.msra.mxu0 0.0
    %763 = vmatprep.subr.mxu0 0.0
    %764 = vmatpush1.msra.mxu0 0.0
    %765 = vmatprep.subr.mxu0 0.0
    %766 = vmatpush1.msra.mxu0 0.0
    %767 = vmatprep.subr.mxu0 0.0
    %768 = vmatpush1.msra.mxu0 0.0
    %769 = vmatprep.subr.mxu0 0.0
    %770 = vmatpush1.msra.mxu0 0.0
    %771 = vmatprep.subr.mxu0 0.0
    %772 = vmatpush1.msra.mxu0 0.0
    %773 = vmatprep.subr.mxu0 0.0
    %774 = vmatpush1.msra.mxu0 0.0
    %775 = vmatprep.subr.mxu0 0.0
    %776 = vmatpush1.msra.mxu0 0.0
    %777 = vmatprep.subr.mxu0 0.0
    %778 = vmatpush1.msra.mxu0 0.0
    %779 = vmatprep.subr.mxu0 0.0
    %780 = vmatpush1.msra.mxu0 0.0
    %781 = vmatprep.subr.mxu0 0.0
    %782 = vmatpush1.msra.mxu0 0.0
    %783 = vmatprep.subr.mxu0 0.0
    %784 = vmatpush1.msra.mxu0 0.0
    %785 = vmatprep.mubr.f32.mxu0 0.0
    %v786 = vand.u32 %v565, 4294901760
    %v787 = vsub.f32 %v565, %v786
    %788 = vmatmul.mubr.f32.gmra.mrb[0].mxu0 %v787
    %v789 = vpop.f32.mrb[0].mxu0
    %v790 = vadd.f32 %v716, %v789
    %v791 = vpop.f32.mrb[0].mxu0
    %792 = vdwg.mxu0
    %793 = vmatprep.subr.mxu0 0.0
    %v794 = vand.u32 %v109, 4294901760
    %795 = vmatpush1.msra.mxu0 %v794
    %796 = vmatprep.subr.mxu0 0.0
    %797 = vmatpush1.msra.mxu0 0.0
    %798 = vmatprep.subr.mxu0 0.0
    %799 = vmatpush1.msra.mxu0 0.0
    %800 = vmatprep.subr.mxu0 0.0
    %801 = vmatpush1.msra.mxu0 0.0
    %802 = vmatprep.subr.mxu0 0.0
    %803 = vmatpush1.msra.mxu0 0.0
    %804 = vmatprep.subr.mxu0 0.0
    %805 = vmatpush1.msra.mxu0 0.0
    %806 = vmatprep.subr.mxu0 0.0
    %807 = vmatpush1.msra.mxu0 0.0
    %808 = vmatprep.subr.mxu0 0.0
    %809 = vmatpush1.msra.mxu0 0.0
    %810 = vmatprep.subr.mxu0 0.0
    %811 = vmatpush1.msra.mxu0 0.0
    %812 = vmatprep.subr.mxu0 0.0
    %813 = vmatpush1.msra.mxu0 0.0
    %814 = vmatprep.subr.mxu0 0.0
    %815 = vmatpush1.msra.mxu0 0.0
    %816 = vmatprep.subr.mxu0 0.0
    %817 = vmatpush1.msra.mxu0 0.0
    %818 = vmatprep.subr.mxu0 0.0
    %819 = vmatpush1.msra.mxu0 0.0
    %820 = vmatprep.subr.mxu0 0.0
    %821 = vmatpush1.msra.mxu0 0.0
    %822 = vmatprep.subr.mxu0 0.0
    %823 = vmatpush1.msra.mxu0 0.0
    %824 = vmatprep.subr.mxu0 0.0
    %825 = vmatpush1.msra.mxu0 0.0
    %826 = vmatprep.subr.mxu0 0.0
    %827 = vmatpush1.msra.mxu0 0.0
    %828 = vmatprep.subr.mxu0 0.0
    %829 = vmatpush1.msra.mxu0 0.0
    %830 = vmatprep.subr.mxu0 0.0
    %831 = vmatpush1.msra.mxu0 0.0
    %832 = vmatprep.subr.mxu0 0.0
    %833 = vmatpush1.msra.mxu0 0.0
    %834 = vmatprep.subr.mxu0 0.0
    %835 = vmatpush1.msra.mxu0 0.0
    %836 = vmatprep.subr.mxu0 0.0
    %837 = vmatpush1.msra.mxu0 0.0
    %838 = vmatprep.subr.mxu0 0.0
    %839 = vmatpush1.msra.mxu0 0.0
    %840 = vmatprep.subr.mxu0 0.0
    %841 = vmatpush1.msra.mxu0 0.0
    %842 = vmatprep.subr.mxu0 0.0
    %843 = vmatpush1.msra.mxu0 0.0
    %844 = vmatprep.subr.mxu0 0.0
    %845 = vmatpush1.msra.mxu0 0.0
    %846 = vmatprep.subr.mxu0 0.0
    %847 = vmatpush1.msra.mxu0 0.0
    %848 = vmatprep.subr.mxu0 0.0
    %849 = vmatpush1.msra.mxu0 0.0
    %850 = vmatprep.subr.mxu0 0.0
    %851 = vmatpush1.msra.mxu0 0.0
    %852 = vmatprep.subr.mxu0 0.0
    %853 = vmatpush1.msra.mxu0 0.0
    %854 = vmatprep.subr.mxu0 0.0
    %855 = vmatpush1.msra.mxu0 0.0
    %856 = vmatprep.subr.mxu0 0.0
    %857 = vmatpush1.msra.mxu0 0.0
    %858 = vmatprep.mubr.f32.mxu0 0.0
    %v859 = vand.u32 %v565, 4294901760
    %v860 = vsub.f32 %v565, %v859
    %v861 = vand.u32 %v860, 4294901760
    %862 = vmatmul.mubr.f32.gmra.mrb[0].mxu0 %v861
    %v863 = vpop.f32.mrb[0].mxu0
    %v864 = vadd.f32 %v790, %v863
    %v865 = vpop.f32.mrb[0].mxu0
    %866 = vdwg.mxu0
    %867 = vmatprep.subr.mxu0 0.0
    %v868 = vand.u32 %v109, 4294901760
    %v869 = vsub.f32 %v109, %v868
    %v870 = vand.u32 %v869, 4294901760
    %871 = vmatpush1.msra.mxu0 %v870
    %872 = vmatprep.subr.mxu0 0.0
    %873 = vmatpush1.msra.mxu0 0.0
    %874 = vmatprep.subr.mxu0 0.0
    %875 = vmatpush1.msra.mxu0 0.0
    %876 = vmatprep.subr.mxu0 0.0
    %877 = vmatpush1.msra.mxu0 0.0
    %878 = vmatprep.subr.mxu0 0.0
    %879 = vmatpush1.msra.mxu0 0.0
    %880 = vmatprep.subr.mxu0 0.0
    %881 = vmatpush1.msra.mxu0 0.0
    %882 = vmatprep.subr.mxu0 0.0
    %883 = vmatpush1.msra.mxu0 0.0
    %884 = vmatprep.subr.mxu0 0.0
    %885 = vmatpush1.msra.mxu0 0.0
    %886 = vmatprep.subr.mxu0 0.0
    %887 = vmatpush1.msra.mxu0 0.0
    %888 = vmatprep.subr.mxu0 0.0
    %889 = vmatpush1.msra.mxu0 0.0
    %890 = vmatprep.subr.mxu0 0.0
    %891 = vmatpush1.msra.mxu0 0.0
    %892 = vmatprep.subr.mxu0 0.0
    %893 = vmatpush1.msra.mxu0 0.0
    %894 = vmatprep.subr.mxu0 0.0
    %895 = vmatpush1.msra.mxu0 0.0
    %896 = vmatprep.subr.mxu0 0.0
    %897 = vmatpush1.msra.mxu0 0.0
    %898 = vmatprep.subr.mxu0 0.0
    %899 = vmatpush1.msra.mxu0 0.0
    %900 = vmatprep.subr.mxu0 0.0
    %901 = vmatpush1.msra.mxu0 0.0
    %902 = vmatprep.subr.mxu0 0.0
    %903 = vmatpush1.msra.mxu0 0.0
    %904 = vmatprep.subr.mxu0 0.0
    %905 = vmatpush1.msra.mxu0 0.0
    %906 = vmatprep.subr.mxu0 0.0
    %907 = vmatpush1.msra.mxu0 0.0
    %908 = vmatprep.subr.mxu0 0.0
    %909 = vmatpush1.msra.mxu0 0.0
    %910 = vmatprep.subr.mxu0 0.0
    %911 = vmatpush1.msra.mxu0 0.0
    %912 = vmatprep.subr.mxu0 0.0
    %913 = vmatpush1.msra.mxu0 0.0
    %914 = vmatprep.subr.mxu0 0.0
    %915 = vmatpush1.msra.mxu0 0.0
    %916 = vmatprep.subr.mxu0 0.0
    %917 = vmatpush1.msra.mxu0 0.0
    %918 = vmatprep.subr.mxu0 0.0
    %919 = vmatpush1.msra.mxu0 0.0
    %920 = vmatprep.subr.mxu0 0.0
    %921 = vmatpush1.msra.mxu0 0.0
    %922 = vmatprep.subr.mxu0 0.0
    %923 = vmatpush1.msra.mxu0 0.0
    %924 = vmatprep.subr.mxu0 0.0
    %925 = vmatpush1.msra.mxu0 0.0
    %926 = vmatprep.subr.mxu0 0.0
    %927 = vmatpush1.msra.mxu0 0.0
    %928 = vmatprep.subr.mxu0 0.0
    %929 = vmatpush1.msra.mxu0 0.0
    %930 = vmatprep.subr.mxu0 0.0
    %931 = vmatpush1.msra.mxu0 0.0
    %932 = vmatprep.subr.mxu0 0.0
    %933 = vmatpush1.msra.mxu0 0.0
    %934 = vmatprep.mubr.f32.mxu0 0.0
    %v935 = vand.u32 %v565, 4294901760
    %936 = vmatmul.mubr.f32.gmra.mrb[0].mxu0 %v935
    %v937 = vpop.f32.mrb[0].mxu0
    %v938 = vadd.f32 %v864, %v937
    %v939 = vpop.f32.mrb[0].mxu0
    %940 = vdwg.mxu0
    %941 = vmatprep.subr.mxu0 0.0
    %v942 = vand.u32 %v109, 4294901760
    %943 = vmatpush1.msra.mxu0 %v942
    %944 = vmatprep.subr.mxu0 0.0
    %945 = vmatpush1.msra.mxu0 0.0
    %946 = vmatprep.subr.mxu0 0.0
    %947 = vmatpush1.msra.mxu0 0.0
    %948 = vmatprep.subr.mxu0 0.0
    %949 = vmatpush1.msra.mxu0 0.0
    %950 = vmatprep.subr.mxu0 0.0
    %951 = vmatpush1.msra.mxu0 0.0
    %952 = vmatprep.subr.mxu0 0.0
    %953 = vmatpush1.msra.mxu0 0.0
    %954 = vmatprep.subr.mxu0 0.0
    %955 = vmatpush1.msra.mxu0 0.0
    %956 = vmatprep.subr.mxu0 0.0
    %957 = vmatpush1.msra.mxu0 0.0
    %958 = vmatprep.subr.mxu0 0.0
    %959 = vmatpush1.msra.mxu0 0.0
    %960 = vmatprep.subr.mxu0 0.0
    %961 = vmatpush1.msra.mxu0 0.0
    %962 = vmatprep.subr.mxu0 0.0
    %963 = vmatpush1.msra.mxu0 0.0
    %964 = vmatprep.subr.mxu0 0.0
    %965 = vmatpush1.msra.mxu0 0.0
    %966 = vmatprep.subr.mxu0 0.0
    %967 = vmatpush1.msra.mxu0 0.0
    %968 = vmatprep.subr.mxu0 0.0
    %969 = vmatpush1.msra.mxu0 0.0
    %970 = vmatprep.subr.mxu0 0.0
    %971 = vmatpush1.msra.mxu0 0.0
    %972 = vmatprep.subr.mxu0 0.0
    %973 = vmatpush1.msra.mxu0 0.0
    %974 = vmatprep.subr.mxu0 0.0
    %975 = vmatpush1.msra.mxu0 0.0
    %976 = vmatprep.subr.mxu0 0.0
    %977 = vmatpush1.msra.mxu0 0.0
    %978 = vmatprep.subr.mxu0 0.0
    %979 = vmatpush1.msra.mxu0 0.0
    %980 = vmatprep.subr.mxu0 0.0
    %981 = vmatpush1.msra.mxu0 0.0
    %982 = vmatprep.subr.mxu0 0.0
    %983 = vmatpush1.msra.mxu0 0.0
    %984 = vmatprep.subr.mxu0 0.0
    %985 = vmatpush1.msra.mxu0 0.0
    %986 = vmatprep.subr.mxu0 0.0
    %987 = vmatpush1.msra.mxu0 0.0
    %988 = vmatprep.subr.mxu0 0.0
    %989 = vmatpush1.msra.mxu0 0.0
    %990 = vmatprep.subr.mxu0 0.0
    %991 = vmatpush1.msra.mxu0 0.0
    %992 = vmatprep.subr.mxu0 0.0
    %993 = vmatpush1.msra.mxu0 0.0
    %994 = vmatprep.subr.mxu0 0.0
    %995 = vmatpush1.msra.mxu0 0.0
    %996 = vmatprep.subr.mxu0 0.0
    %997 = vmatpush1.msra.mxu0 0.0
    %998 = vmatprep.subr.mxu0 0.0
    %999 = vmatpush1.msra.mxu0 0.0
    %1000 = vmatprep.subr.mxu0 0.0
    %1001 = vmatpush1.msra.mxu0 0.0
    %1002 = vmatprep.subr.mxu0 0.0
    %1003 = vmatpush1.msra.mxu0 0.0
    %1004 = vmatprep.subr.mxu0 0.0
    %1005 = vmatpush1.msra.mxu0 0.0
    %1006 = vmatprep.mubr.f32.mxu0 0.0
    %v1007 = vand.u32 %v565, 4294901760
    %1008 = vmatmul.mubr.f32.gmra.mrb[0].mxu0 %v1007
    %v1009 = vpop.f32.mrb[0].mxu0
    %v1010 = vadd.f32 %v938, %v1009
    %v1011 = vpop.f32.mrb[0].mxu0
    %1012 = vdwg.mxu0
    %v1013 = vadd.f32 %v110, %v561
    %v1014 = vadd.f32 %v111, %v1010
    %vm1015 = vcmask 253952
    %1016 = vst.msk [vmem:[#allocation11] sm:$0x1] %vm1015, %v1013
    %1017 = vst.msk [vmem:[#allocation11 + $0x1] sm:$0x1] %vm1015, %v1014
    // Predicated region
    $region46: #{tpu_custom_call.1} parent=1 // pred_check
      _
    $region47: #{tpu_custom_call.1} parent=1 // pred_check_branch
      %1019 = sbr.rel (0) target = $region49
    $region48: #{tpu_custom_call.1} parent=1 // pred_region
      %s1021 = ssub.s32 32, 32
      %1022 = vsyncadd [#allocation4], %s1021
      %s1023 = sshll.u32 [#allocation11], 4
      %s1024 = int_to_ptr.vmem [resolvable:$true] %s1023
      %1029 = dma.vmem_to_hbm [thread:$0]  %s1024, 32, %s5, [#allocation4], 16, 16, 1
    $region49: #{tpu_custom_call.1} parent=1 // pred_fallthru
      _
    // Predicated region
    $region50: #{tpu_custom_call.1} parent=1 // pred_check
      _
    $region51: #{tpu_custom_call.1} parent=1 // pred_check_branch
      %1031 = sbr.rel (0) target = $region53
    $region52: #{tpu_custom_call.1} parent=1 // pred_region
      %1032 = dma.done [#allocation4], 32
    $region53: #{tpu_custom_call.1} parent=1 // pred_fallthru
      _
    %1033 = vsyncpa [#allocation3], 1
    %1034 = vsyncpa [#allocation6], 1
    %1035 = vsyncpa [#allocation9], 1
    %1036 = vsyncpa [#allocation4], 1

</llo_original>
